<compile_context>
chip_gen: v7x
topology: tpu7x:2x2x1
jax: 0.10.0
libtpu: 0.0.40
codegen_flags: <defaults>
</compile_context>

<pallas_src>
import functools

import jax
import jax.numpy as jnp
from jax import lax
from jax.experimental import pallas as pl
from jax.experimental.pallas import tpu as pltpu


def _round_up(x: int, m: int) -> int:
    return ((x + m - 1) // m) * m


def _accuracy_kernel(out_ref, tgt_ref, o_ref, *, n_total: int, tile_n: int):
    i = pl.program_id(0)

    x = out_ref[...]                                   # (TN, C) f32 logits
    t = tgt_ref[...]                                   # (TN, 1) int32 targets

    # argmax over the class axis (first index of the max, matching torch.argmax;
    # softmax omitted because it is monotone and does not change the argmax).
    num_classes = x.shape[-1]
    m = jnp.max(x, axis=-1, keepdims=True)             # (TN, 1)
    col = lax.broadcasted_iota(jnp.int32, x.shape, 1)  # (TN, C)
    idx = jnp.min(jnp.where(x >= m, col, num_classes),
                  axis=-1, keepdims=True)              # (TN, 1) int32

    match = (idx == t).astype(jnp.float32)             # (TN, 1)

    # mask padded tail rows of the last block (keeps the count exact)
    row = lax.broadcasted_iota(jnp.int32, match.shape, 0) + i * tile_n
    match = jnp.where(row < n_total, match, 0.0)

    # independent per-block partial "corrects" count
    o_ref[0] = jnp.sum(match, keepdims=True)           # (1, 1) into (1,1,1) block


def accuracy(output: jax.Array, target: jax.Array, *, tile_n: int | None = None) -> jax.Array:
    """output: (N, C) float logits, target: (N,) int class ids -> scalar accuracy."""
    n, c = output.shape
    target2d = target.astype(jnp.int32).reshape(n, 1)   # metadata-only reshape

    # batch-axis tile: multiple of 8 (f32 sublane), ~4 MiB double-buffered so it
    # fits the scoped-VMEM defaults on every generation (incl. v7x 64 MiB part).
    if tile_n is None:
        budget_bytes = 4 * 1024 * 1024
        tile_n = max(8, (budget_bytes // (2 * c * 4)) // 8 * 8)
    tile_n = min(tile_n, _round_up(n, 8))
    tile_n = max(8, (tile_n // 8) * 8)
    num_blocks = pl.cdiv(n, tile_n)

    kernel = functools.partial(_accuracy_kernel, n_total=n, tile_n=tile_n)

    cost = pl.CostEstimate(
        flops=5 * n * c,                       # max + cmp + select + min + cmp
        transcendentals=0,                     # softmax skipped (argmax-invariant)
        bytes_accessed=n * c * 4 + n * 4 + num_blocks * 4,
    )

    partials = pl.pallas_call(
        kernel,
        out_shape=jax.ShapeDtypeStruct((num_blocks, 1, 1), jnp.float32),
        grid=(num_blocks,),
        in_specs=[
            pl.BlockSpec((tile_n, c), lambda i: (i, 0)),
            pl.BlockSpec((tile_n, 1), lambda i: (i, 0)),
        ],
        out_specs=pl.BlockSpec((1, 1, 1), lambda i: (i, 0, 0)),
        compiler_params=pltpu.CompilerParams(
            dimension_semantics=("parallel",),
        ),
        cost_estimate=cost,
    )(output, target2d)

    # TODO(synk): Accuracy is a running metric (self.n / self.corrects persist
    # across calls); that host-side state accumulation stays outside the kernel.
    return jnp.sum(partials) / jnp.float32(n)


def _reference(output: jax.Array, target: jax.Array) -> jax.Array:
    pred = jnp.argmax(jax.nn.softmax(output, axis=1), axis=1)
    return jnp.sum((pred == target).astype(jnp.float32)) / output.shape[0]


if __name__ == "__main__":
    key = jax.random.PRNGKey(0)

    # small classification-head shapes: batch=16, classes=10
    k1, k2, k3, k4 = jax.random.split(key, 4)
    N, C = 16, 10
    output = jax.random.normal(k1, (N, C), dtype=jnp.float32)
    target = jax.random.randint(k2, (N,), 0, C, dtype=jnp.int32)

    acc = accuracy(output, target)
    jax.block_until_ready(acc)
    ref = _reference(output, target)
    assert jnp.allclose(acc, ref, rtol=1e-6, atol=1e-6), (acc, ref)

    # multi-block + ragged-tail path (N=20, tile_n=8 -> 3 blocks, 4 padded rows)
    N2 = 20
    output2 = jax.random.normal(k3, (N2, C), dtype=jnp.float32)
    target2 = jax.random.randint(k4, (N2,), 0, C, dtype=jnp.int32)
    acc2 = accuracy(output2, target2, tile_n=8)
    jax.block_until_ready(acc2)
    ref2 = _reference(output2, target2)
    assert jnp.allclose(acc2, ref2, rtol=1e-6, atol=1e-6), (acc2, ref2)

    print("KERNEL_OK")
</pallas_src>

<mosaic_0001>
module attributes {stable_mosaic.version = 11 : i64} {
  func.func @_accuracy_kernel(%arg0: i32, %arg1: memref<16x10xf32, #tpu.memory_space<vmem>>, %arg2: memref<16x1xi32, #tpu.memory_space<vmem>>, %arg3: memref<1x1x1xf32, #tpu.memory_space<vmem>>) attributes {dimension_semantics = [#tpu.dimension_semantics<parallel>], iteration_bounds = array<i64: 1>, scalar_prefetch = 0 : i64, scratch_operands = 0 : i64, tpu.core_type = #tpu.core_type<tc>, window_params = [{transform_indices = @transform_0, window_bounds = array<i64: 16, 10>}, {transform_indices = @transform_1, window_bounds = array<i64: 16, 1>}, {transform_indices = @transform_2, window_bounds = array<i64: 1, 1, 1>}]} {
    %c0 = arith.constant 0 : index
    %c0_0 = arith.constant 0 : index
    %0 = vector.load %arg1[%c0, %c0_0] : memref<16x10xf32, #tpu.memory_space<vmem>>, vector<16x10xf32>
    %c0_1 = arith.constant 0 : index
    %c0_2 = arith.constant 0 : index
    %1 = vector.load %arg2[%c0_1, %c0_2] : memref<16x1xi32, #tpu.memory_space<vmem>>, vector<16x1xi32>
    %cst = arith.constant dense<0xFF800000> : vector<16xf32>
    %2 = vector.multi_reduction <maximumf>, %0, %cst [1] : vector<16x10xf32> to vector<16xf32>
    %3 = vector.shape_cast %2 : vector<16xf32> to vector<16x1xf32>
    %4 = tpu.iota {dimensions = array<i32: 1>} : vector<16x10xi32>
    %5 = vector.broadcast %3 : vector<16x1xf32> to vector<16x10xf32>
    %6 = arith.cmpf oge, %0, %5 : vector<16x10xf32>
    %c10_i32 = arith.constant 10 : i32
    %7 = vector.broadcast %c10_i32 : i32 to vector<16x10xi32>
    %8 = arith.select %6, %4, %7 : vector<16x10xi1>, vector<16x10xi32>
    %cst_3 = arith.constant dense<2147483647> : vector<16xi32>
    %9 = vector.multi_reduction <minsi>, %8, %cst_3 [1] : vector<16x10xi32> to vector<16xi32>
    %10 = vector.shape_cast %9 : vector<16xi32> to vector<16x1xi32>
    %11 = arith.cmpi eq, %10, %1 : vector<16x1xi32>
    %12 = arith.extui %11 : vector<16x1xi1> to vector<16x1xi32>
    %13 = arith.sitofp %12 : vector<16x1xi32> to vector<16x1xf32>
    %14 = tpu.iota {dimensions = array<i32: 0>} : vector<16x1xi32>
    %c16_i32 = arith.constant 16 : i32
    %15 = arith.muli %arg0, %c16_i32 : i32
    %16 = vector.broadcast %15 : i32 to vector<16x1xi32>
    %17 = arith.addi %14, %16 : vector<16x1xi32>
    %c16_i32_4 = arith.constant 16 : i32
    %18 = vector.broadcast %c16_i32_4 : i32 to vector<16x1xi32>
    %19 = arith.cmpi slt, %17, %18 : vector<16x1xi32>
    %cst_5 = arith.constant 0.000000e+00 : f32
    %20 = vector.broadcast %cst_5 : f32 to vector<16x1xf32>
    %21 = arith.select %19, %13, %20 : vector<16x1xi1>, vector<16x1xf32>
    %22 = vector.shape_cast %21 : vector<16x1xf32> to vector<1x16x1xf32>
    %cst_6 = arith.constant dense<0.000000e+00> : vector<1xf32>
    %23 = vector.multi_reduction <add>, %22, %cst_6 [1, 2] : vector<1x16x1xf32> to vector<1xf32>
    %24 = vector.shape_cast %23 : vector<1xf32> to vector<1x1x1xf32>
    %25 = vector.extract %24[0, 0, 0] : f32 from vector<1x1x1xf32>
    %26 = vector.broadcast %25 : f32 to vector<1x1xf32>
    %c0_7 = arith.constant 0 : index
    %c0_8 = arith.constant 0 : index
    %c0_9 = arith.constant 0 : index
    %27 = vector.load %arg3[%c0_7, %c0_8, %c0_9] : memref<1x1x1xf32, #tpu.memory_space<vmem>>, vector<1x1x1xf32>
    %28 = vector.shape_cast %27 : vector<1x1x1xf32> to vector<1x1xf32>
    %29 = vector.shape_cast %26 : vector<1x1xf32> to vector<1x1x1xf32>
    tpu.vector_store %arg3[%c0_7, %c0_8, %c0_9], %29 {strides = array<i32>} : memref<1x1x1xf32, #tpu.memory_space<vmem>>, vector<1x1x1xf32>,
    return
  }
  func.func @transform_0(%arg0: i32) -> (i32, i32) {
    %c0_i32 = arith.constant 0 : i32
    %c0_i32_0 = arith.constant 0 : i32
    return %arg0, %c0_i32 : i32, i32
  }
  func.func @transform_1(%arg0: i32) -> (i32, i32) {
    %c0_i32 = arith.constant 0 : i32
    %c0_i32_0 = arith.constant 0 : i32
    return %arg0, %c0_i32 : i32, i32
  }
  func.func @transform_2(%arg0: i32) -> (i32, i32, i32) {
    %c0_i32 = arith.constant 0 : i32
    %c0_i32_0 = arith.constant 0 : i32
    %c0_i32_1 = arith.constant 0 : i32
    return %arg0, %c0_i32, %c0_i32_0 : i32, i32, i32
  }
}

</mosaic_0001>

<llo_original>
// kernel: tpu_custom_call.1
$region0: #{tpu_custom_call.1}
  #allocation0 [shape = 'u32[]', space=smem, size = 0x4, offset = 0x4, fixed_abs, tag = 'smem constant byte address 0x4 - core index']
  #allocation1 [shape = 'u32[144,128]{1,0:T(1,128)}', space=vmem, size = 0x12000, scoped, tag = 'internal scratch']
  %s0 = inlined_call_operand.vmem [shape: f32[16,10], index: 0, kind: input, shape index: {}]
  %s1 = inlined_call_operand.vmem [shape: s32[16,1], index: 1, kind: input, shape index: {}]
  %s2 = inlined_call_operand.hbm [shape: f32[1,1,1], index: 2, kind: output, shape index: {}]
  %s3 = sld [smem:[#allocation0]]
  $region18: #{tpu_custom_call.1} parent=0
    _
  %s5 = ssub.s32 1, %s3
  %s6 = scalar_select 0, %s5, %s3
  $region1: #{tpu_custom_call.1} parent=0
    #allocation2 [shape = 'u8[512]{0}', space=vmem, size = 0x400, scoped, tag = 'output window, operand 0, single buffered']
    #allocation3 [shape = 's32[1]{0}', space=sflag, size = 0x4, scoped, tag = 'scoped memory for tpu_custom_call.1']
    %7 = vsyncpa [#allocation3], 0
    // Predicated region
    $region2: #{tpu_custom_call.1} parent=1 // pred_check
      _
    $region3: #{tpu_custom_call.1} parent=1 // pred_check_branch
      %9 = sbr.rel (0) target = $region5
    $region4: #{tpu_custom_call.1} parent=1 // pred_region
      _
    $region5: #{tpu_custom_call.1} parent=1 // pred_fallthru
      _
    // Predicated region
    $region6: #{tpu_custom_call.1} parent=1 // pred_check
      _
    $region7: #{tpu_custom_call.1} parent=1 // pred_check_branch
      %11 = sbr.rel (0) target = $region9
    $region8: #{tpu_custom_call.1} parent=1 // pred_region
      _
    $region9: #{tpu_custom_call.1} parent=1 // pred_fallthru
      _
    %v12 = vld [vmem:[%s0] sm:$0xff]
    %v13 = vld [vmem:[%s0 + $0x8] sm:$0xff]
    %v14 = vld [vmem:[%s1] sm:$0xff]
    %v15 = vld [vmem:[%s1 + $0x8] sm:$0xff]
    %vm16 = vcmask 80896
    %v17 = vsel %vm16, %v12, -inf
    %18 = vmax.xlane.f32.xlu0 %v17
    %v19 = vpop.xlane.xlu0 %18
    %v20 = vsel %vm16, %v13, -inf
    %21 = vmax.xlane.f32.xlu0 %v20
    %v22 = vpop.xlane.xlu0 %21
    %v23 = vlaneseq
    %v24 = vand.u32 %v23, 127
    %vm25 = vcmp.ge.f32.partialorder %v12, %v19
    %vm26 = vcmp.ge.f32.partialorder %v13, %v22
    %v27 = vsel %vm25, %v24, 10
    %v28 = vsel %vm26, %v24, 10
    %v29 = vsel %vm16, %v27, 2147483647
    %v30 = vand.u32 %v29, 65535
    %v31 = vshra.s32 %v29, 16
    %v32 = vcvt.s32.f32 %v30
    %v33 = vcvt.s32.f32 %v31
    %34 = vmin.xlane.f32.xlu0 %v33
    %v35 = vpop.xlane.xlu0 %34
    %vm36 = vcmp.eq.f32.partialorder %v33, %v35
    %v37 = vsel %vm36, %v32, inf
    %38 = vmin.xlane.f32.xlu0 %v37
    %v39 = vpop.xlane.xlu0 %38
    %v40 = vcvt.f32.s32 %v39
    %v41 = vcvt.f32.s32 %v35
    %v42 = vshll.u32 %v41, 16
    %v43 = vadd.s32 %v42, %v40
    %v44 = vsel %vm16, %v28, 2147483647
    %v45 = vand.u32 %v44, 65535
    %v46 = vshra.s32 %v44, 16
    %v47 = vcvt.s32.f32 %v45
    %v48 = vcvt.s32.f32 %v46
    %49 = vmin.xlane.f32.xlu0 %v48
    %v50 = vpop.xlane.xlu0 %49
    %vm51 = vcmp.eq.f32.partialorder %v48, %v50
    %v52 = vsel %vm51, %v47, inf
    %53 = vmin.xlane.f32.xlu0 %v52
    %v54 = vpop.xlane.xlu0 %53
    %v55 = vcvt.f32.s32 %v54
    %v56 = vcvt.f32.s32 %v50
    %v57 = vshll.u32 %v56, 16
    %v58 = vadd.s32 %v57, %v55
    %vm59 = vcmp.eq.s32.totalorder %v43, %v14
    %vm60 = vcmp.eq.s32.totalorder %v58, %v15
    %v61 = vsel %vm59, 1, 0
    %v62 = vsel %vm60, 1, 0
    %v63 = vcvt.s32.f32 %v61
    %v64 = vcvt.s32.f32 %v62
    %v65 = vlaneseq
    %v66 = vshrl.u32 %v65, 7
    %v67 = vadd.s32 %v66, 8
    %s68 = smul.u32 0, 16
    %v69 = vstv %s68
    %v70 = vadd.s32 %v66, %v69
    %v71 = vadd.s32 %v67, %v69
    %vm72 = vcmp.lt.s32.totalorder %v70, 16
    %vm73 = vcmp.lt.s32.totalorder %v71, 16
    %v74 = vsel %vm72, %v63, 0.0
    %v75 = vsel %vm73, %v64, 0.0
    %vm76 = vcmask 7168
    %v77 = vsel %vm76, %v74, 0.0
    %v78 = vsel %vm76, %v75, 0.0
    %v79 = vadd.f32 %v77, %v78
    %80 = vadd.xlane.f32.xlu0 %v79
    %v81 = vpop.xlane.xlu0 %80
    %v82 = vrot.slane %v81, 4
    %v83 = vadd.f32 %v81, %v82
    %v84 = vrot.slane %v83, 2
    %v85 = vadd.f32 %v83, %v84
    %v86 = vrot.slane %v85, 1
    %v87 = vadd.f32 %v85, %v86
    %s88 = vtos %v87
    %v89 = vstv %s88
    %vm90 = vcmask 0
    %91 = vst.msk [vmem:[#allocation2] sm:$0x1] %vm90, %v89
    // Predicated region
    $region10: #{tpu_custom_call.1} parent=1 // pred_check
      _
    $region11: #{tpu_custom_call.1} parent=1 // pred_check_branch
      %93 = sbr.rel (0) target = $region13
    $region12: #{tpu_custom_call.1} parent=1 // pred_region
      %s95 = ssub.s32 16, 16
      %96 = vsyncadd [#allocation3], %s95
      %s98 = sshll.u32 [#allocation2], 4
      %s99 = int_to_ptr.vmem [resolvable:$true] %s98
      %101 = dma.vmem_to_hbm [thread:$0]  %s99, 16, %s2, [#allocation3]
    $region13: #{tpu_custom_call.1} parent=1 // pred_fallthru
      _
    // Predicated region
    $region14: #{tpu_custom_call.1} parent=1 // pred_check
      _
    $region15: #{tpu_custom_call.1} parent=1 // pred_check_branch
      %103 = sbr.rel (0) target = $region17
    $region16: #{tpu_custom_call.1} parent=1 // pred_region
      %104 = dma.done [#allocation3], 16
    $region17: #{tpu_custom_call.1} parent=1 // pred_fallthru
      _
    %105 = vsyncpa [#allocation3], 1

</llo_original>
